<compile_context>
chip_gen: v6e
topology: v6e:2x2x1
jax: 0.10.0
libtpu: 0.0.40
codegen_flags: <defaults>
</compile_context>

<pallas_src>
import math

import jax
import jax.numpy as jnp
from jax.experimental import pallas as pl
from jax.experimental.pallas import tpu as pltpu

_LN_EPS = 1e-5  # PyTorch nn.LayerNorm default


def _patch_merging_kernel(xt_ref, xb_ref, wt_ref, wb_ref, bias_ref, o_ref):
    """Fused LayerNorm(4C) + Linear(4C->Cout, affine folded) for one row tile.

    xt_ref:  (th, W2, 2C)  even-H rows; trailing 2C = [x0 | x2] channels
    xb_ref:  (th, W2, 2C)  odd-H rows;  trailing 2C = [x1 | x3] channels
    wt_ref:  (2C, Cout)    gamma-folded weight rows for [x0 | x2]
    wb_ref:  (2C, Cout)    gamma-folded weight rows for [x1 | x3]
    bias_ref:(1, Cout)     beta @ w   (f32)
    o_ref:   (th*W2, Cout)
    """
    th, w2, two_c = xt_ref.shape
    tokens = th * w2
    four_c = 2 * two_c

    # Collapse (th, W2) -> tokens.  This is a free relayout when W2 % 8 == 0
    # (sublane-aligned); otherwise Mosaic inserts a VMEM relayout (still far
    # cheaper than an extra HBM pass).
    xt = xt_ref[...].reshape(tokens, two_c).astype(jnp.float32)
    xb = xb_ref[...].reshape(tokens, two_c).astype(jnp.float32)

    inv_n = 1.0 / float(four_c)
    mean = (jnp.sum(xt, axis=-1, keepdims=True)
            + jnp.sum(xb, axis=-1, keepdims=True)) * inv_n
    ct = xt - mean
    cb = xb - mean
    var = (jnp.sum(ct * ct, axis=-1, keepdims=True)
           + jnp.sum(cb * cb, axis=-1, keepdims=True)) * inv_n
    inv = jax.lax.rsqrt(var + _LN_EPS)

    # Normalized activations in the weight's native dtype (f32 accumulate).
    ht = (ct * inv).astype(wt_ref.dtype)
    hb = (cb * inv).astype(wb_ref.dtype)
    y = jnp.dot(ht, wt_ref[...], preferred_element_type=jnp.float32)
    y = y + jnp.dot(hb, wb_ref[...], preferred_element_type=jnp.float32)
    y = y + bias_ref[...]                       # (1, Cout) f32 broadcast
    o_ref[...] = y.astype(o_ref.dtype)


def _choose_rows_per_step(n_rows, w2, in_row_bytes, out_row_bytes, w_bytes):
    """Pick how many (b, h2) rows each grid step handles.

    Targets >= ~2 MB of input DMA per step (amortize ~0.35 us/step pipeline
    overhead) while keeping the double-buffered working set <= ~24 MiB so it
    fits comfortably on v7x (64 MiB VMEM); v5e/v6e have more VMEM and just
    need vmem_limit_bytes raised (done in the wrapper).
    """
    tile_budget = max((24 << 20) - 2 * w_bytes, 4 << 20)
    per_row_vmem = 2 * (in_row_bytes + out_row_bytes)       # double buffered
    th_cap = max(1, tile_budget // per_row_vmem)
    th_target = max(1, -(-(2 << 20) // in_row_bytes))       # ceil(2MB / row)
    th = min(th_cap, th_target)
    if n_rows >= 2:                  # keep >= 2 grid steps when possible so
        th = min(th, -(-n_rows // 2))  # the parallel axis shards across TCs
    if th >= n_rows:
        return n_rows
    align = 8 // math.gcd(w2, 8)     # th*W2 tokens must be a multiple of 8
    th = max(align, (th // align) * align)
    return min(th, n_rows)


def patch_merging_forward(x, H, W, gamma, beta, w, *, rows_per_step=None):
    """PatchMerging forward.

    Args:
      x:     (B, H*W, C)
      H, W:  static spatial resolution (Python ints)
      gamma: (4C,)  LayerNorm weight
      beta:  (4C,)  LayerNorm bias
      w:     (4C, Cout) reduction weight, stored (in, out); Cout = 2C
      rows_per_step: optional override of the (b, h2)-row tile

    Returns:
      (B, ceil(H/2)*ceil(W/2), Cout)
    """
    B, L, C = x.shape
    assert L == H * W, "input feature has wrong size"
    four_c = 4 * C
    c_out = w.shape[1]
    assert w.shape == (four_c, c_out)
    assert gamma.shape == (four_c,) and beta.shape == (four_c,)

    # ---- fold the LayerNorm affine into the reduction weight (exact math) ----
    w32 = w.astype(jnp.float32)
    w_scaled = gamma.astype(jnp.float32)[:, None] * w32            # (4C, Cout)
    bias = (beta.astype(jnp.float32) @ w32).reshape(1, c_out)      # (1, Cout)
    # Kernel channel order: top row tile = [x0 | x2], bottom = [x1 | x3]
    # (PyTorch concat order is [x0, x1, x2, x3]); permute weight rows once.
    w_top = jnp.concatenate([w_scaled[0:C], w_scaled[2 * C:3 * C]], 0).astype(w.dtype)
    w_bot = jnp.concatenate([w_scaled[C:2 * C], w_scaled[3 * C:4 * C]], 0).astype(w.dtype)

    # ---- spatial pad to even H/W (same as the PyTorch module) ----
    xg = x.reshape(B, H, W, C)
    pad_h, pad_w = H % 2, W % 2
    if pad_h or pad_w:
        xg = jnp.pad(xg, ((0, 0), (0, pad_h), (0, pad_w), (0, 0)))
    Hp, Wp = H + pad_h, W + pad_w
    H2, W2 = Hp // 2, Wp // 2

    # ---- copy-free view exposing the 2x2 merge to the BlockSpec DMAs ----
    # (B, Hp, Wp, C) == (B*H2, 2, W2, 2C): dim 1 is the H-parity; the trailing
    # 2C dim is [w-parity-0 channels | w-parity-1 channels].  The gather is
    # performed by the pipeline DMAs — no (tokens, 4C) slab in HBM.
    n_rows = B * H2
    two_c = 2 * C
    xv = xg.reshape(n_rows, 2, W2, two_c)

    in_isz = jnp.dtype(x.dtype).itemsize
    out_isz = jnp.dtype(x.dtype).itemsize
    w_isz = jnp.dtype(w.dtype).itemsize
    w_bytes = 2 * two_c * c_out * w_isz + 4 * c_out
    in_row_bytes = W2 * four_c * in_isz
    out_row_bytes = W2 * c_out * out_isz

    th = rows_per_step or _choose_rows_per_step(
        n_rows, W2, in_row_bytes, out_row_bytes, w_bytes)
    th = max(1, min(th, n_rows))
    grid = pl.cdiv(n_rows, th)

    vmem_need = 2 * th * (in_row_bytes + out_row_bytes) + 2 * w_bytes
    vmem_limit = int(min(max(vmem_need + (6 << 20), 16 << 20), 56 << 20))

    tokens = n_rows * W2
    cost = pl.CostEstimate(
        flops=2 * tokens * four_c * c_out + 8 * tokens * four_c,
        transcendentals=tokens,
        bytes_accessed=(tokens * four_c * in_isz + tokens * c_out * out_isz
                        + 2 * two_c * c_out * w_isz),
    )

    out2d = pl.pallas_call(
        _patch_merging_kernel,
        out_shape=jax.ShapeDtypeStruct((tokens, c_out), x.dtype),
        grid_spec=pltpu.PrefetchScalarGridSpec(
            num_scalar_prefetch=0,
            grid=(grid,),
            in_specs=[
                # even-H rows (x0|x2) and odd-H rows (x1|x3) of the same array
                pl.BlockSpec((th, None, W2, two_c), lambda i: (i, 0, 0, 0)),
                pl.BlockSpec((th, None, W2, two_c), lambda i: (i, 1, 0, 0)),
                pl.BlockSpec((two_c, c_out), lambda i: (0, 0)),
                pl.BlockSpec((two_c, c_out), lambda i: (0, 0)),
                pl.BlockSpec((1, c_out), lambda i: (0, 0)),
            ],
            out_specs=pl.BlockSpec((th * W2, c_out), lambda i: (i, 0)),
        ),
        compiler_params=pltpu.CompilerParams(
            dimension_semantics=("parallel",),
            vmem_limit_bytes=vmem_limit),
        cost_estimate=cost,
    )(xv, xv, w_top, w_bot, bias)

    # Output already holds exactly B*H2*W2 tokens in (b, h2, w2) order.
    return out2d.reshape(B, H2 * W2, c_out)


def init_patch_merging_params(key, dim, dtype=jnp.float32):
    """PyTorch defaults: LayerNorm(4*dim) affine=1/0, Linear(4d->2d, bias=False).
    Weight stored as (in, out)."""
    four_c, two_c = 4 * dim, 2 * dim
    lim = 1.0 / math.sqrt(four_c)
    w = jax.random.uniform(key, (four_c, two_c), minval=-lim, maxval=lim,
                           dtype=dtype)
    gamma = jnp.ones((four_c,), dtype=dtype)
    beta = jnp.zeros((four_c,), dtype=dtype)
    return gamma, beta, w


def _ref_patch_merging(x, H, W, gamma, beta, w):
    """Plain-JAX reference mirroring the PyTorch forward."""
    B, L, C = x.shape
    xg = x.reshape(B, H, W, C)
    pad_h, pad_w = H % 2, W % 2
    if pad_h or pad_w:
        xg = jnp.pad(xg, ((0, 0), (0, pad_h), (0, pad_w), (0, 0)))
    x0 = xg[:, 0::2, 0::2, :]
    x1 = xg[:, 1::2, 0::2, :]
    x2 = xg[:, 0::2, 1::2, :]
    x3 = xg[:, 1::2, 1::2, :]
    xm = jnp.concatenate([x0, x1, x2, x3], axis=-1)
    x2d = xm.reshape(B, -1, 4 * C).astype(jnp.float32)
    mean = jnp.mean(x2d, axis=-1, keepdims=True)
    var = jnp.mean((x2d - mean) ** 2, axis=-1, keepdims=True)
    xn = (x2d - mean) / jnp.sqrt(var + _LN_EPS) * gamma.astype(jnp.float32) \
        + beta.astype(jnp.float32)
    return jnp.dot(xn, w.astype(jnp.float32)).astype(x.dtype)


if __name__ == "__main__":
    key = jax.random.PRNGKey(0)
    kx, kw, kg, kb, kx2 = jax.random.split(key, 5)

    # Small shapes: B=2, H=W=16, C=32  ->  4C=128, output channels 2C=64.
    B, H, W, C = 2, 16, 16, 32
    x = jax.random.normal(kx, (B, H * W, C), dtype=jnp.float32)
    _, _, w = init_patch_merging_params(kw, C)
    # Non-trivial affine so the gamma/beta folding is actually exercised.
    gamma = jax.random.uniform(kg, (4 * C,), minval=0.5, maxval=1.5,
                               dtype=jnp.float32)
    beta = 0.1 * jax.random.normal(kb, (4 * C,), dtype=jnp.float32)

    y = patch_merging_forward(x, H, W, gamma, beta, w)
    jax.block_until_ready(y)
    ref = _ref_patch_merging(x, H, W, gamma, beta, w)
    assert y.shape == (B, (H // 2) * (W // 2), 2 * C), y.shape
    assert jnp.allclose(y, ref, atol=1e-4, rtol=1e-4), \
        float(jnp.max(jnp.abs(y - ref)))

    # Odd resolution exercises the pad path (H=15 -> padded to 16).
    Ho, Wo = 15, 16
    x_odd = jax.random.normal(kx2, (B, Ho * Wo, C), dtype=jnp.float32)
    y_odd = patch_merging_forward(x_odd, Ho, Wo, gamma, beta, w)
    jax.block_until_ready(y_odd)
    ref_odd = _ref_patch_merging(x_odd, Ho, Wo, gamma, beta, w)
    assert y_odd.shape == (B, 8 * 8, 2 * C), y_odd.shape
    assert jnp.allclose(y_odd, ref_odd, atol=1e-4, rtol=1e-4), \
        float(jnp.max(jnp.abs(y_odd - ref_odd)))

    print("KERNEL_OK")
</pallas_src>

<mosaic_0001>
module attributes {stable_mosaic.version = 11 : i64} {
  func.func @_patch_merging_kernel(%arg0: i32, %arg1: memref<8x1x8x64xf32, #tpu.memory_space<vmem>>, %arg2: memref<8x1x8x64xf32, #tpu.memory_space<vmem>>, %arg3: memref<64x64xf32, #tpu.memory_space<vmem>>, %arg4: memref<64x64xf32, #tpu.memory_space<vmem>>, %arg5: memref<1x64xf32, #tpu.memory_space<vmem>>, %arg6: memref<64x64xf32, #tpu.memory_space<vmem>>) attributes {dimension_semantics = [#tpu.dimension_semantics<parallel>], iteration_bounds = array<i64: 2>, scalar_prefetch = 0 : i64, scratch_operands = 0 : i64, tpu.core_type = #tpu.core_type<tc>, window_params = [{transform_indices = @transform_0, window_bounds = array<i64: 8, 1, 8, 64>}, {transform_indices = @transform_1, window_bounds = array<i64: 8, 1, 8, 64>}, {pipeline_mode = #tpu.pipeline_mode<synchronous>, transform_indices = @transform_2, window_bounds = array<i64: 64, 64>}, {pipeline_mode = #tpu.pipeline_mode<synchronous>, transform_indices = @transform_3, window_bounds = array<i64: 64, 64>}, {pipeline_mode = #tpu.pipeline_mode<synchronous>, transform_indices = @transform_4, window_bounds = array<i64: 1, 64>}, {transform_indices = @transform_5, window_bounds = array<i64: 64, 64>}]} {
    %c0 = arith.constant 0 : index
    %c0_0 = arith.constant 0 : index
    %c0_1 = arith.constant 0 : index
    %c0_2 = arith.constant 0 : index
    %0 = vector.load %arg1[%c0, %c0_0, %c0_1, %c0_2] : memref<8x1x8x64xf32, #tpu.memory_space<vmem>>, vector<8x1x8x64xf32>
    %1 = vector.shape_cast %0 : vector<8x1x8x64xf32> to vector<8x8x64xf32>
    %2 = vector.shape_cast %1 : vector<8x8x64xf32> to vector<64x64xf32>
    %c0_3 = arith.constant 0 : index
    %c0_4 = arith.constant 0 : index
    %c0_5 = arith.constant 0 : index
    %c0_6 = arith.constant 0 : index
    %3 = vector.load %arg2[%c0_3, %c0_4, %c0_5, %c0_6] : memref<8x1x8x64xf32, #tpu.memory_space<vmem>>, vector<8x1x8x64xf32>
    %4 = vector.shape_cast %3 : vector<8x1x8x64xf32> to vector<8x8x64xf32>
    %5 = vector.shape_cast %4 : vector<8x8x64xf32> to vector<64x64xf32>
    %cst = arith.constant dense<0.000000e+00> : vector<64xf32>
    %6 = vector.multi_reduction <add>, %2, %cst [1] : vector<64x64xf32> to vector<64xf32>
    %7 = vector.shape_cast %6 : vector<64xf32> to vector<64x1xf32>
    %cst_7 = arith.constant dense<0.000000e+00> : vector<64xf32>
    %8 = vector.multi_reduction <add>, %5, %cst_7 [1] : vector<64x64xf32> to vector<64xf32>
    %9 = vector.shape_cast %8 : vector<64xf32> to vector<64x1xf32>
    %10 = arith.addf %7, %9 : vector<64x1xf32>
    %cst_8 = arith.constant 7.812500e-03 : f32
    %11 = vector.broadcast %cst_8 : f32 to vector<64x1xf32>
    %12 = arith.mulf %10, %11 : vector<64x1xf32>
    %13 = vector.broadcast %12 : vector<64x1xf32> to vector<64x64xf32>
    %14 = arith.subf %2, %13 : vector<64x64xf32>
    %15 = vector.broadcast %12 : vector<64x1xf32> to vector<64x64xf32>
    %16 = arith.subf %5, %15 : vector<64x64xf32>
    %17 = arith.mulf %14, %14 : vector<64x64xf32>
    %cst_9 = arith.constant dense<0.000000e+00> : vector<64xf32>
    %18 = vector.multi_reduction <add>, %17, %cst_9 [1] : vector<64x64xf32> to vector<64xf32>
    %19 = vector.shape_cast %18 : vector<64xf32> to vector<64x1xf32>
    %20 = arith.mulf %16, %16 : vector<64x64xf32>
    %cst_10 = arith.constant dense<0.000000e+00> : vector<64xf32>
    %21 = vector.multi_reduction <add>, %20, %cst_10 [1] : vector<64x64xf32> to vector<64xf32>
    %22 = vector.shape_cast %21 : vector<64xf32> to vector<64x1xf32>
    %23 = arith.addf %19, %22 : vector<64x1xf32>
    %cst_11 = arith.constant 7.812500e-03 : f32
    %24 = vector.broadcast %cst_11 : f32 to vector<64x1xf32>
    %25 = arith.mulf %23, %24 : vector<64x1xf32>
    %cst_12 = arith.constant 9.99999974E-6 : f32
    %26 = vector.broadcast %cst_12 : f32 to vector<64x1xf32>
    %27 = arith.addf %25, %26 : vector<64x1xf32>
    %28 = math.rsqrt %27 : vector<64x1xf32>
    %29 = vector.broadcast %28 : vector<64x1xf32> to vector<64x64xf32>
    %30 = arith.mulf %14, %29 : vector<64x64xf32>
    %31 = vector.broadcast %28 : vector<64x1xf32> to vector<64x64xf32>
    %32 = arith.mulf %16, %31 : vector<64x64xf32>
    %c0_13 = arith.constant 0 : index
    %c0_14 = arith.constant 0 : index
    %33 = vector.load %arg3[%c0_13, %c0_14] : memref<64x64xf32, #tpu.memory_space<vmem>>, vector<64x64xf32>
    %cst_15 = arith.constant dense<0.000000e+00> : vector<64x64xf32>
    %34 = tpu.matmul %30, %33, %cst_15 {dimension_numbers = #tpu.dot_dimension_numbers<[1], [0], [0], [1], [0, 0, 1, 1], [], []>} : vector<64x64xf32>, vector<64x64xf32>, vector<64x64xf32> -> vector<64x64xf32>
    %c0_16 = arith.constant 0 : index
    %c0_17 = arith.constant 0 : index
    %35 = vector.load %arg4[%c0_16, %c0_17] : memref<64x64xf32, #tpu.memory_space<vmem>>, vector<64x64xf32>
    %cst_18 = arith.constant dense<0.000000e+00> : vector<64x64xf32>
    %36 = tpu.matmul %32, %35, %cst_18 {dimension_numbers = #tpu.dot_dimension_numbers<[1], [0], [0], [1], [0, 0, 1, 1], [], []>} : vector<64x64xf32>, vector<64x64xf32>, vector<64x64xf32> -> vector<64x64xf32>
    %37 = arith.addf %34, %36 : vector<64x64xf32>
    %c0_19 = arith.constant 0 : index
    %c0_20 = arith.constant 0 : index
    %38 = vector.load %arg5[%c0_19, %c0_20] : memref<1x64xf32, #tpu.memory_space<vmem>>, vector<1x64xf32>
    %39 = vector.broadcast %38 : vector<1x64xf32> to vector<64x64xf32>
    %40 = arith.addf %37, %39 : vector<64x64xf32>
    %c0_21 = arith.constant 0 : index
    %c0_22 = arith.constant 0 : index
    %41 = vector.load %arg6[%c0_21, %c0_22] : memref<64x64xf32, #tpu.memory_space<vmem>>, vector<64x64xf32>
    tpu.vector_store %arg6[%c0_21, %c0_22], %40 {strides = array<i32>} : memref<64x64xf32, #tpu.memory_space<vmem>>, vector<64x64xf32>,
    return
  }
  func.func @transform_0(%arg0: i32) -> (i32, i32, i32, i32) {
    %c0_i32 = arith.constant 0 : i32
    %c0_i32_0 = arith.constant 0 : i32
    %c0_i32_1 = arith.constant 0 : i32
    %c0_i32_2 = arith.constant 0 : i32
    return %arg0, %c0_i32, %c0_i32_0, %c0_i32_1 : i32, i32, i32, i32
  }
  func.func @transform_1(%arg0: i32) -> (i32, i32, i32, i32) {
    %c1_i32 = arith.constant 1 : i32
    %c0_i32 = arith.constant 0 : i32
    %c0_i32_0 = arith.constant 0 : i32
    %c0_i32_1 = arith.constant 0 : i32
    return %arg0, %c1_i32, %c0_i32, %c0_i32_0 : i32, i32, i32, i32
  }
  func.func @transform_2(%arg0: i32) -> (i32, i32) {
    %c0_i32 = arith.constant 0 : i32
    %c0_i32_0 = arith.constant 0 : i32
    %c0_i32_1 = arith.constant 0 : i32
    return %c0_i32, %c0_i32_0 : i32, i32
  }
  func.func @transform_3(%arg0: i32) -> (i32, i32) {
    %c0_i32 = arith.constant 0 : i32
    %c0_i32_0 = arith.constant 0 : i32
    %c0_i32_1 = arith.constant 0 : i32
    return %c0_i32, %c0_i32_0 : i32, i32
  }
  func.func @transform_4(%arg0: i32) -> (i32, i32) {
    %c0_i32 = arith.constant 0 : i32
    %c0_i32_0 = arith.constant 0 : i32
    %c0_i32_1 = arith.constant 0 : i32
    return %c0_i32, %c0_i32_0 : i32, i32
  }
  func.func @transform_5(%arg0: i32) -> (i32, i32) {
    %c0_i32 = arith.constant 0 : i32
    %c0_i32_0 = arith.constant 0 : i32
    return %arg0, %c0_i32 : i32, i32
  }
}

</mosaic_0001>

<llo_original>
// kernel: tpu_custom_call.1
$region0: #{tpu_custom_call.1}
  #allocation0 [shape = 'u32[]', space=smem, size = 0x4, offset = 0x4, fixed_abs, tag = 'smem constant byte address 0x4 - core index']
  #allocation1 [shape = 'u32[144,128]{1,0:T(1,128)}', space=vmem, size = 0x12000, scoped, tag = 'internal scratch']
  %s0 = inlined_call_operand.hbm [shape: f32[16,2,8,64], index: 0, kind: input, shape index: {}]
  %s1 = inlined_call_operand.hbm [shape: f32[16,2,8,64], index: 1, kind: input, shape index: {}]
  %s2 = inlined_call_operand.hbm [shape: f32[64,64], index: 2, kind: input, shape index: {}]
  %s3 = inlined_call_operand.hbm [shape: f32[64,64], index: 3, kind: input, shape index: {}]
  %s4 = inlined_call_operand.vmem [shape: f32[1,64], index: 4, kind: input, shape index: {}]
  %s5 = inlined_call_operand.vmem [shape: f32[128,64], index: 5, kind: output, shape index: {}]
  %s6 = sld [smem:[#allocation0]]
  $region69: #{tpu_custom_call.1} parent=0
    _
  %s8 = ssub.s32 1, %s6
  %s9 = scalar_select 0, %s8, %s6
  $region1: #{tpu_custom_call.1} parent=0
    #allocation2 [shape = 'u8[65536]{0}', space=vmem, size = 0x10000, scoped, tag = 'input window, operand 0']
    #allocation3 [shape = 's32[2]{0}', space=sflag, size = 0x8, scoped, tag = 'scoped memory for tpu_custom_call.1']
    #allocation4 [shape = 'u8[65536]{0}', space=vmem, size = 0x10000, scoped, tag = 'input window, operand 1']
    #allocation5 [shape = 's32[2]{0}', space=sflag, size = 0x8, scoped, tag = 'scoped memory for tpu_custom_call.1']
    #allocation6 [shape = 'u8[32768]{0}', space=vmem, size = 0x8000, scoped, tag = 'input window, operand 2, single buffered']
    #allocation7 [shape = 'u8[32768]{0}', space=vmem, size = 0x8000, scoped, tag = 'input window, operand 3, single buffered']
    #allocation8 [shape = 's32[1]{0}', space=sflag, size = 0x4, scoped, tag = 'scoped memory for tpu_custom_call.1']
    %10 = vsyncpa [#allocation3], 0
    %s11 = scalar_lea.sflag [#allocation3], 1
    %12 = vsyncpa %s11, 0
    %13 = vsyncpa [#allocation5], 0
    %s14 = scalar_lea.sflag [#allocation5], 1
    %15 = vsyncpa %s14, 0
    %16 = vsyncpa [#allocation8], 0
    loop: start=0, step=1, limit=4
    $region2: #{tpu_custom_call.1} parent=1 // loop_pre_header
      _
    $region3: #{tpu_custom_call.1} parent=1 // loop_header
      %s18 = sphi 0, %s22
      %p19 = scmp.ge.s32.totalorder %s18, 4
      %s28 = sphi 0, %s30
      %s31 = sphi 0, %s28
      %s32 = sphi 0, %s31
      %s48 = sphi 0, %s32
      %s54 = sphi 0, %s56
      %s57 = sphi 0, %s54
      %s58 = sphi 0, %s57
      %s74 = sphi 0, %s58
      %s78 = sphi 0, %s78
      %s80 = sphi 0, %s78
      %s81 = sphi 0, %s80
      %s95 = sphi 0, %s81
      %s99 = sphi 0, %s99
      %s101 = sphi 0, %s99
      %s102 = sphi 0, %s101
      %s116 = sphi 0, %s102
      %s120 = sphi 0, %s120
      %s122 = sphi 0, %s120
      %s123 = sphi 0, %s122
      %s137 = sphi 0, %s123
      %s143 = sphi 0, %s145
      %s146 = sphi 0, %s143
      %s147 = sphi 0, %s146
      %s163 = sphi 0, %s147
    $region4: #{tpu_custom_call.1} parent=1 // loop_header_branch
      %21 = sbr.rel (%p19) target = $region8
    $region5: #{tpu_custom_call.1} parent=1 // loop_body
      %s23 = ssub.s32 %s18, 1
      %s24 = ssub.s32 %s18, 2
      %s25 = sadd.s32 %s18, 1
      %s26 = ssub.s32 %s18, %s25
      %p27 = scmp.eq.s32.totalorder %s26, 0
      %s29 = sadd.s32 %s28, 1
      %s30 = scalar_select %p27, %s28, %s29
      %p33 = pneg %p27
      %p34 = scmp.eq.s32.totalorder %s18, 1
      %p35 = por %p33, %p34
      %p36 = scmp.ne.s32.totalorder %s28, %s31
      %p37 = scmp.eq.s32.totalorder %s18, 0
      %p38 = por %p36, %p37
      %p39 = scmp.ne.s32.totalorder %s28, %s31
      %p40 = scmp.eq.s32.totalorder %s23, 1
      %p41 = por %p39, %p40
      %p42 = scmp.ne.s32.totalorder %s31, %s32
      %p43 = scmp.eq.s32.totalorder %s23, 0
      %p44 = por %p42, %p43
      %p45 = scmp.ne.s32.totalorder %s31, %s32
      %p46 = scmp.eq.s32.totalorder %s24, 1
      %p47 = por %p45, %p46
      %p49 = scmp.ne.s32.totalorder %s32, %s48
      %p50 = scmp.eq.s32.totalorder %s24, 0
      %p51 = por %p49, %p50
      %s52 = ssub.s32 %s18, %s25
      %p53 = scmp.eq.s32.totalorder %s52, 0
      %s55 = sadd.s32 %s54, 1
      %s56 = scalar_select %p53, %s54, %s55
      %p59 = pneg %p53
      %p60 = scmp.eq.s32.totalorder %s18, 1
      %p61 = por %p59, %p60
      %p62 = scmp.ne.s32.totalorder %s54, %s57
      %p63 = scmp.eq.s32.totalorder %s18, 0
      %p64 = por %p62, %p63
      %p65 = scmp.ne.s32.totalorder %s54, %s57
      %p66 = scmp.eq.s32.totalorder %s23, 1
      %p67 = por %p65, %p66
      %p68 = scmp.ne.s32.totalorder %s57, %s58
      %p69 = scmp.eq.s32.totalorder %s23, 0
      %p70 = por %p68, %p69
      %p71 = scmp.ne.s32.totalorder %s57, %s58
      %p72 = scmp.eq.s32.totalorder %s24, 1
      %p73 = por %p71, %p72
      %p75 = scmp.ne.s32.totalorder %s58, %s74
      %p76 = scmp.eq.s32.totalorder %s24, 0
      %p77 = por %p75, %p76
      %s79 = sadd.s32 %s78, 1
      %p82 = scmp.eq.s32.totalorder %s18, 1
      %p83 = scmp.ne.s32.totalorder %s78, %s80
      %p84 = scmp.eq.s32.totalorder %s18, 0
      %p85 = por %p83, %p84
      %p86 = scmp.ne.s32.totalorder %s78, %s80
      %p87 = scmp.eq.s32.totalorder %s23, 1
      %p88 = por %p86, %p87
      %p89 = scmp.ne.s32.totalorder %s80, %s81
      %p90 = scmp.eq.s32.totalorder %s23, 0
      %p91 = por %p89, %p90
      %p92 = scmp.ne.s32.totalorder %s80, %s81
      %p93 = scmp.eq.s32.totalorder %s24, 1
      %p94 = por %p92, %p93
      %p96 = scmp.ne.s32.totalorder %s81, %s95
      %p97 = scmp.eq.s32.totalorder %s24, 0
      %p98 = por %p96, %p97
      %s100 = sadd.s32 %s99, 1
      %p103 = scmp.eq.s32.totalorder %s18, 1
      %p104 = scmp.ne.s32.totalorder %s99, %s101
      %p105 = scmp.eq.s32.totalorder %s18, 0
      %p106 = por %p104, %p105
      %p107 = scmp.ne.s32.totalorder %s99, %s101
      %p108 = scmp.eq.s32.totalorder %s23, 1
      %p109 = por %p107, %p108
      %p110 = scmp.ne.s32.totalorder %s101, %s102
      %p111 = scmp.eq.s32.totalorder %s23, 0
      %p112 = por %p110, %p111
      %p113 = scmp.ne.s32.totalorder %s101, %s102
      %p114 = scmp.eq.s32.totalorder %s24, 1
      %p115 = por %p113, %p114
      %p117 = scmp.ne.s32.totalorder %s102, %s116
      %p118 = scmp.eq.s32.totalorder %s24, 0
      %p119 = por %p117, %p118
      %s121 = sadd.s32 %s120, 1
      %p124 = scmp.eq.s32.totalorder %s18, 1
      %p125 = scmp.ne.s32.totalorder %s120, %s122
      %p126 = scmp.eq.s32.totalorder %s18, 0
      %p127 = por %p125, %p126
      %p128 = scmp.ne.s32.totalorder %s120, %s122
      %p129 = scmp.eq.s32.totalorder %s23, 1
      %p130 = por %p128, %p129
      %p131 = scmp.ne.s32.totalorder %s122, %s123
      %p132 = scmp.eq.s32.totalorder %s23, 0
      %p133 = por %p131, %p132
      %p134 = scmp.ne.s32.totalorder %s122, %s123
      %p135 = scmp.eq.s32.totalorder %s24, 1
      %p136 = por %p134, %p135
      %p138 = scmp.ne.s32.totalorder %s123, %s137
      %p139 = scmp.eq.s32.totalorder %s24, 0
      %p140 = por %p138, %p139
      %s141 = ssub.s32 %s18, %s25
      %p142 = scmp.eq.s32.totalorder %s141, 0
      %s144 = sadd.s32 %s143, 1
      %s145 = scalar_select %p142, %s143, %s144
      %p148 = pneg %p142
      %p149 = scmp.eq.s32.totalorder %s18, 1
      %p150 = por %p148, %p149
      %p151 = scmp.ne.s32.totalorder %s143, %s146
      %p152 = scmp.eq.s32.totalorder %s18, 0
      %p153 = por %p151, %p152
      %p154 = scmp.ne.s32.totalorder %s143, %s146
      %p155 = scmp.eq.s32.totalorder %s23, 1
      %p156 = por %p154, %p155
      %p157 = scmp.ne.s32.totalorder %s146, %s147
      %p158 = scmp.eq.s32.totalorder %s23, 0
      %p159 = por %p157, %p158
      %p160 = scmp.ne.s32.totalorder %s146, %s147
      %p161 = scmp.eq.s32.totalorder %s24, 1
      %p162 = por %p160, %p161
      %p164 = scmp.ne.s32.totalorder %s147, %s163
      %p165 = scmp.eq.s32.totalorder %s24, 0
      %p166 = por %p164, %p165
      %p167 = scmp.le.s32.totalorder 1, %s18
      %p168 = scmp.lt.s32.totalorder %s18, 3
      %p169 = pnand %p167, %p168
      %p170 = pneg %p169
      // Predicated region
      $region9: #{tpu_custom_call.1} parent=5 // pred_check
        _
      $region10: #{tpu_custom_call.1} parent=5 // pred_check_branch
        %172 = sbr.rel (%p169) target = $region12
      $region11: #{tpu_custom_call.1} parent=5 // pred_region
        %s173 = ssub.s32 %s18, 1
        // Predicated region
        $region13: #{tpu_custom_call.1} parent=11 // pred_check
          %p174 = pneg %p91
        $region14: #{tpu_custom_call.1} parent=11 // pred_check_branch
          %176 = sbr.rel (%p174) target = $region16
        $region15: #{tpu_custom_call.1} parent=11 // pred_region
          %s178 = ssub.s32 1024, 1024
          %179 = vsyncadd [#allocation5], %s178
          %s180 = sshll.u32 [#allocation6], 4
          %s181 = int_to_ptr.vmem [resolvable:$true] %s180
          %186 = dma.hbm_to_vmem [thread:$0]  %s2, 1024, %s181, [#allocation5], 128, 128, 8
        $region16: #{tpu_custom_call.1} parent=11 // pred_fallthru
          _
        // Predicated region
        $region17: #{tpu_custom_call.1} parent=11 // pred_check
          %p187 = pneg %p112
        $region18: #{tpu_custom_call.1} parent=11 // pred_check_branch
          %189 = sbr.rel (%p187) target = $region20
        $region19: #{tpu_custom_call.1} parent=11 // pred_region
          %s191 = ssub.s32 1024, 1024
          %192 = vsyncadd [#allocation8], %s191
          %s193 = sshll.u32 [#allocation7], 4
          %s194 = int_to_ptr.vmem [resolvable:$true] %s193
          %199 = dma.hbm_to_vmem [thread:$0]  %s3, 1024, %s194, [#allocation8], 128, 128, 8
        $region20: #{tpu_custom_call.1} parent=11 // pred_fallthru
          _
        // Predicated region
        $region21: #{tpu_custom_call.1} parent=11 // pred_check
          %p200 = pneg %p133
        $region22: #{tpu_custom_call.1} parent=11 // pred_check_branch
          %202 = sbr.rel (%p200) target = $region24
        $region23: #{tpu_custom_call.1} parent=11 // pred_region
          _
        $region24: #{tpu_custom_call.1} parent=11 // pred_fallthru
          _
      $region12: #{tpu_custom_call.1} parent=5 // pred_fallthru
        _
      %p203 = scmp.lt.s32.totalorder %s18, 2
      // Predicated region
      $region25: #{tpu_custom_call.1} parent=5 // pred_check
        %p204 = pneg %p203
      $region26: #{tpu_custom_call.1} parent=5 // pred_check_branch
        %206 = sbr.rel (%p204) target = $region28
      $region27: #{tpu_custom_call.1} parent=5 // pred_region
        // Predicated region
        $region29: #{tpu_custom_call.1} parent=27 // pred_check
          %p207 = pneg %p38
        $region30: #{tpu_custom_call.1} parent=27 // pred_check_branch
          %209 = sbr.rel (%p207) target = $region32
        $region31: #{tpu_custom_call.1} parent=27 // pred_region
          %s210 = sand.u32 %s28, 1
          %s211 = scalar_lea.sflag [#allocation3], %s210
          %s212 = sand.u32 %s28, 1
          %s213 = smul.addr %s212, 64
          %s214 = scalar_lea.vmem [#allocation2], %s213
          %s215 = smul.u32 8, %s18
          %s217 = ssub.s32 1024, 1024
          %218 = vsyncadd %s211, %s217
          %s219 = smul.addr %s215, 2
          %s220 = smul.addr %s219, 128
          %s221 = scalar_lea.hbm %s0, %s220
          %s222 = sshll.u32 %s214, 4
          %s223 = int_to_ptr.vmem [resolvable:$true] %s222
          %228 = dma.hbm_to_vmem [thread:$0]  %s221, 1024, %s223, %s211, 256, 128, 8
        $region32: #{tpu_custom_call.1} parent=27 // pred_fallthru
          _
        // Predicated region
        $region33: #{tpu_custom_call.1} parent=27 // pred_check
          %p229 = pneg %p64
        $region34: #{tpu_custom_call.1} parent=27 // pred_check_branch
          %231 = sbr.rel (%p229) target = $region36
        $region35: #{tpu_custom_call.1} parent=27 // pred_region
          %s232 = sand.u32 %s18, 1
          %s233 = scalar_lea.sflag [#allocation5], %s232
          %s234 = sand.u32 %s54, 1
          %s235 = smul.addr %s234, 64
          %s236 = scalar_lea.vmem [#allocation4], %s235
          %s237 = smul.u32 8, %s18
          %s239 = ssub.s32 1024, 1024
          %240 = vsyncadd %s233, %s239
          %s241 = smul.addr %s237, 2
          %s242 = sadd.s32 1, %s241
          %s243 = smul.addr %s242, 128
          %s244 = scalar_lea.hbm %s1, %s243
          %s245 = sshll.u32 %s236, 4
          %s246 = int_to_ptr.vmem [resolvable:$true] %s245
          %251 = dma.hbm_to_vmem [thread:$0]  %s244, 1024, %s246, %s233, 256, 128, 8
        $region36: #{tpu_custom_call.1} parent=27 // pred_fallthru
          _
      $region28: #{tpu_custom_call.1} parent=5 // pred_fallthru
        _
      %p252 = scmp.le.s32.totalorder 1, %s18
      %p253 = scmp.lt.s32.totalorder %s18, 3
      %p254 = pnand %p252, %p253
      %p255 = pneg %p254
      // Predicated region
      $region37: #{tpu_custom_call.1} parent=5 // pred_check
        _
      $region38: #{tpu_custom_call.1} parent=5 // pred_check_branch
        %257 = sbr.rel (%p254) target = $region40
      $region39: #{tpu_custom_call.1} parent=5 // pred_region
        %s258 = ssub.s32 %s18, 1
        %s259 = sand.u32 %s31, 1
        %s260 = scalar_lea.sflag [#allocation3], %s259
        %s261 = sand.u32 %s31, 1
        %s262 = smul.addr %s261, 64
        %s263 = scalar_lea.vmem [#allocation2], %s262
        // Predicated region
        $region41: #{tpu_custom_call.1} parent=39 // pred_check
          %p264 = pneg %p44
        $region42: #{tpu_custom_call.1} parent=39 // pred_check_branch
          %266 = sbr.rel (%p264) target = $region44
        $region43: #{tpu_custom_call.1} parent=39 // pred_region
          %267 = dma.done %s260, 1024
        $region44: #{tpu_custom_call.1} parent=39 // pred_fallthru
          _
        %s268 = sand.u32 %s23, 1
        %s269 = scalar_lea.sflag [#allocation5], %s268
        %s270 = sand.u32 %s57, 1
        %s271 = smul.addr %s270, 64
        %s272 = scalar_lea.vmem [#allocation4], %s271
        // Predicated region
        $region45: #{tpu_custom_call.1} parent=39 // pred_check
          %p273 = pneg %p70
        $region46: #{tpu_custom_call.1} parent=39 // pred_check_branch
          %275 = sbr.rel (%p273) target = $region48
        $region47: #{tpu_custom_call.1} parent=39 // pred_region
          %276 = dma.done %s269, 1024
        $region48: #{tpu_custom_call.1} parent=39 // pred_fallthru
          _
        // Predicated region
        $region49: #{tpu_custom_call.1} parent=39 // pred_check
          %p277 = pneg %p91
        $region50: #{tpu_custom_call.1} parent=39 // pred_check_branch
          %279 = sbr.rel (%p277) target = $region52
        $region51: #{tpu_custom_call.1} parent=39 // pred_region
          %280 = dma.done [#allocation5], 1024
        $region52: #{tpu_custom_call.1} parent=39 // pred_fallthru
          _
        // Predicated region
        $region53: #{tpu_custom_call.1} parent=39 // pred_check
          %p281 = pneg %p112
        $region54: #{tpu_custom_call.1} parent=39 // pred_check_branch
          %283 = sbr.rel (%p281) target = $region56
        $region55: #{tpu_custom_call.1} parent=39 // pred_region
          %284 = dma.done [#allocation8], 1024
        $region56: #{tpu_custom_call.1} parent=39 // pred_fallthru
          _
        %s285 = sand.u32 %s31, 1
        %s286 = scalar_lea.sflag [#allocation3], %s285
        %s287 = sand.u32 %s31, 1
        %s288 = smul.addr %s287, 64
        %s289 = scalar_lea.vmem [#allocation2], %s288
        %p290 = pneg %p44
        %p291 = pneg %p41
        %s292 = sand.u32 %s23, 1
        %s293 = scalar_lea.sflag [#allocation5], %s292
        %s294 = sand.u32 %s57, 1
        %s295 = smul.addr %s294, 64
        %s296 = scalar_lea.vmem [#allocation4], %s295
        %p297 = pneg %p70
        %p298 = pneg %p67
        %p299 = pneg %p91
        %p300 = pneg %p88
        %p301 = pneg %p112
        %p302 = pneg %p109
        %p303 = pneg %p133
        %p304 = pneg %p130
        %p305 = pneg %p159
        %p306 = pneg %p156
        %s307 = smul.u32 8, %s23
        %p308 = scmp.lt.s32.totalorder %s307, 15
        %s309 = scalar_select %p308, %s307, 15
        %s310 = smul.addr %s309, 8
        %s311 = scalar_lea.vmem %s5, %s310
        %s312 = smul.u32 8, %s23
        %s313 = smul.u32 8, %s23
        %s314 = smul.u32 8, %s23
        %p315 = scmp.lt.s32.totalorder %s314, 15
        %s316 = scalar_select %p315, %s314, 15
        %s317 = smul.addr %s316, 8
        %s318 = scalar_lea.vmem %s5, %s317
        %s319 = smul.u32 8, %s23
        %v320 = vld [vmem:[%s263] sm:$0xff]
        %v321 = vld [vmem:[%s263 + $0x8] sm:$0xff]
        %v322 = vld [vmem:[%s263 + $0x10] sm:$0xff]
        %v323 = vld [vmem:[%s263 + $0x18] sm:$0xff]
        %v324 = vld [vmem:[%s263 + $0x20] sm:$0xff]
        %v325 = vld [vmem:[%s263 + $0x28] sm:$0xff]
        %v326 = vld [vmem:[%s263 + $0x30] sm:$0xff]
        %v327 = vld [vmem:[%s263 + $0x38] sm:$0xff]
        %v328 = vld [vmem:[%s272] sm:$0xff]
        %v329 = vld [vmem:[%s272 + $0x8] sm:$0xff]
        %v330 = vld [vmem:[%s272 + $0x10] sm:$0xff]
        %v331 = vld [vmem:[%s272 + $0x18] sm:$0xff]
        %v332 = vld [vmem:[%s272 + $0x20] sm:$0xff]
        %v333 = vld [vmem:[%s272 + $0x28] sm:$0xff]
        %v334 = vld [vmem:[%s272 + $0x30] sm:$0xff]
        %v335 = vld [vmem:[%s272 + $0x38] sm:$0xff]
        %vm336 = vcmask 523264
        %v337 = vsel %vm336, %v320, 0.0
        %338 = vadd.xlane.f32.xlu0 %v337
        %v339 = vpop.xlane.xlu0 %338
        %v340 = vsel %vm336, %v321, 0.0
        %341 = vadd.xlane.f32.xlu0 %v340
        %v342 = vpop.xlane.xlu0 %341
        %v343 = vsel %vm336, %v322, 0.0
        %344 = vadd.xlane.f32.xlu0 %v343
        %v345 = vpop.xlane.xlu0 %344
        %v346 = vsel %vm336, %v323, 0.0
        %347 = vadd.xlane.f32.xlu0 %v346
        %v348 = vpop.xlane.xlu0 %347
        %v349 = vsel %vm336, %v324, 0.0
        %350 = vadd.xlane.f32.xlu0 %v349
        %v351 = vpop.xlane.xlu0 %350
        %v352 = vsel %vm336, %v325, 0.0
        %353 = vadd.xlane.f32.xlu0 %v352
        %v354 = vpop.xlane.xlu0 %353
        %v355 = vsel %vm336, %v326, 0.0
        %356 = vadd.xlane.f32.xlu0 %v355
        %v357 = vpop.xlane.xlu0 %356
        %v358 = vsel %vm336, %v327, 0.0
        %359 = vadd.xlane.f32.xlu0 %v358
        %v360 = vpop.xlane.xlu0 %359
        %v361 = vsel %vm336, %v328, 0.0
        %362 = vadd.xlane.f32.xlu0 %v361
        %v363 = vpop.xlane.xlu0 %362
        %v364 = vsel %vm336, %v329, 0.0
        %365 = vadd.xlane.f32.xlu0 %v364
        %v366 = vpop.xlane.xlu0 %365
        %v367 = vsel %vm336, %v330, 0.0
        %368 = vadd.xlane.f32.xlu0 %v367
        %v369 = vpop.xlane.xlu0 %368
        %v370 = vsel %vm336, %v331, 0.0
        %371 = vadd.xlane.f32.xlu0 %v370
        %v372 = vpop.xlane.xlu0 %371
        %v373 = vsel %vm336, %v332, 0.0
        %374 = vadd.xlane.f32.xlu0 %v373
        %v375 = vpop.xlane.xlu0 %374
        %v376 = vsel %vm336, %v333, 0.0
        %377 = vadd.xlane.f32.xlu0 %v376
        %v378 = vpop.xlane.xlu0 %377
        %v379 = vsel %vm336, %v334, 0.0
        %380 = vadd.xlane.f32.xlu0 %v379
        %v381 = vpop.xlane.xlu0 %380
        %v382 = vsel %vm336, %v335, 0.0
        %383 = vadd.xlane.f32.xlu0 %v382
        %v384 = vpop.xlane.xlu0 %383
        %v385 = vadd.f32 %v339, %v363
        %v386 = vadd.f32 %v342, %v366
        %v387 = vadd.f32 %v345, %v369
        %v388 = vadd.f32 %v348, %v372
        %v389 = vadd.f32 %v351, %v375
        %v390 = vadd.f32 %v354, %v378
        %v391 = vadd.f32 %v357, %v381
        %v392 = vadd.f32 %v360, %v384
        %v393 = vmul.f32 %v385, 0.0078125
        %v394 = vmul.f32 %v386, 0.0078125
        %v395 = vmul.f32 %v387, 0.0078125
        %v396 = vmul.f32 %v388, 0.0078125
        %v397 = vmul.f32 %v389, 0.0078125
        %v398 = vmul.f32 %v390, 0.0078125
        %v399 = vmul.f32 %v391, 0.0078125
        %v400 = vmul.f32 %v392, 0.0078125
        %v401 = vsub.f32 %v320, %v393
        %v402 = vsub.f32 %v321, %v394
        %v403 = vsub.f32 %v322, %v395
        %v404 = vsub.f32 %v323, %v396
        %v405 = vsub.f32 %v324, %v397
        %v406 = vsub.f32 %v325, %v398
        %v407 = vsub.f32 %v326, %v399
        %v408 = vsub.f32 %v327, %v400
        %v409 = vsub.f32 %v328, %v393
        %v410 = vsub.f32 %v329, %v394
        %v411 = vsub.f32 %v330, %v395
        %v412 = vsub.f32 %v331, %v396
        %v413 = vsub.f32 %v332, %v397
        %v414 = vsub.f32 %v333, %v398
        %v415 = vsub.f32 %v334, %v399
        %v416 = vsub.f32 %v335, %v400
        %v417 = vmul.f32 %v401, %v401
        %v418 = vmul.f32 %v402, %v402
        %v419 = vmul.f32 %v403, %v403
        %v420 = vmul.f32 %v404, %v404
        %v421 = vmul.f32 %v405, %v405
        %v422 = vmul.f32 %v406, %v406
        %v423 = vmul.f32 %v407, %v407
        %v424 = vmul.f32 %v408, %v408
        %v425 = vsel %vm336, %v417, 0.0
        %426 = vadd.xlane.f32.xlu0 %v425
        %v427 = vpop.xlane.xlu0 %426
        %v428 = vsel %vm336, %v418, 0.0
        %429 = vadd.xlane.f32.xlu0 %v428
        %v430 = vpop.xlane.xlu0 %429
        %v431 = vsel %vm336, %v419, 0.0
        %432 = vadd.xlane.f32.xlu0 %v431
        %v433 = vpop.xlane.xlu0 %432
        %v434 = vsel %vm336, %v420, 0.0
        %435 = vadd.xlane.f32.xlu0 %v434
        %v436 = vpop.xlane.xlu0 %435
        %v437 = vsel %vm336, %v421, 0.0
        %438 = vadd.xlane.f32.xlu0 %v437
        %v439 = vpop.xlane.xlu0 %438
        %v440 = vsel %vm336, %v422, 0.0
        %441 = vadd.xlane.f32.xlu0 %v440
        %v442 = vpop.xlane.xlu0 %441
        %v443 = vsel %vm336, %v423, 0.0
        %444 = vadd.xlane.f32.xlu0 %v443
        %v445 = vpop.xlane.xlu0 %444
        %v446 = vsel %vm336, %v424, 0.0
        %447 = vadd.xlane.f32.xlu0 %v446
        %v448 = vpop.xlane.xlu0 %447
        %v449 = vmul.f32 %v409, %v409
        %v450 = vmul.f32 %v410, %v410
        %v451 = vmul.f32 %v411, %v411
        %v452 = vmul.f32 %v412, %v412
        %v453 = vmul.f32 %v413, %v413
        %v454 = vmul.f32 %v414, %v414
        %v455 = vmul.f32 %v415, %v415
        %v456 = vmul.f32 %v416, %v416
        %v457 = vsel %vm336, %v449, 0.0
        %458 = vadd.xlane.f32.xlu0 %v457
        %v459 = vpop.xlane.xlu0 %458
        %v460 = vsel %vm336, %v450, 0.0
        %461 = vadd.xlane.f32.xlu0 %v460
        %v462 = vpop.xlane.xlu0 %461
        %v463 = vsel %vm336, %v451, 0.0
        %464 = vadd.xlane.f32.xlu0 %v463
        %v465 = vpop.xlane.xlu0 %464
        %v466 = vsel %vm336, %v452, 0.0
        %467 = vadd.xlane.f32.xlu0 %v466
        %v468 = vpop.xlane.xlu0 %467
        %v469 = vsel %vm336, %v453, 0.0
        %470 = vadd.xlane.f32.xlu0 %v469
        %v471 = vpop.xlane.xlu0 %470
        %v472 = vsel %vm336, %v454, 0.0
        %473 = vadd.xlane.f32.xlu0 %v472
        %v474 = vpop.xlane.xlu0 %473
        %v475 = vsel %vm336, %v455, 0.0
        %476 = vadd.xlane.f32.xlu0 %v475
        %v477 = vpop.xlane.xlu0 %476
        %v478 = vsel %vm336, %v456, 0.0
        %479 = vadd.xlane.f32.xlu0 %v478
        %v480 = vpop.xlane.xlu0 %479
        %v481 = vadd.f32 %v427, %v459
        %v482 = vadd.f32 %v430, %v462
        %v483 = vadd.f32 %v433, %v465
        %v484 = vadd.f32 %v436, %v468
        %v485 = vadd.f32 %v439, %v471
        %v486 = vadd.f32 %v442, %v474
        %v487 = vadd.f32 %v445, %v477
        %v488 = vadd.f32 %v448, %v480
        %v489 = vmul.f32 %v481, 0.0078125
        %v490 = vmul.f32 %v482, 0.0078125
        %v491 = vmul.f32 %v483, 0.0078125
        %v492 = vmul.f32 %v484, 0.0078125
        %v493 = vmul.f32 %v485, 0.0078125
        %v494 = vmul.f32 %v486, 0.0078125
        %v495 = vmul.f32 %v487, 0.0078125
        %v496 = vmul.f32 %v488, 0.0078125
        %v497 = vadd.f32 %v489, 1e-05
        %v498 = vadd.f32 %v490, 1e-05
        %v499 = vadd.f32 %v491, 1e-05
        %v500 = vadd.f32 %v492, 1e-05
        %v501 = vadd.f32 %v493, 1e-05
        %v502 = vadd.f32 %v494, 1e-05
        %v503 = vadd.f32 %v495, 1e-05
        %v504 = vadd.f32 %v496, 1e-05
        %v505 = vrsqrt.pop %v497
        %v506 = vrsqrt.pop %v498
        %v507 = vrsqrt.pop %v499
        %v508 = vrsqrt.pop %v500
        %v509 = vrsqrt.pop %v501
        %v510 = vrsqrt.pop %v502
        %v511 = vrsqrt.pop %v503
        %v512 = vrsqrt.pop %v504
        %v513 = vmul.f32 %v401, %v505
        %v514 = vmul.f32 %v402, %v506
        %v515 = vmul.f32 %v403, %v507
        %v516 = vmul.f32 %v404, %v508
        %v517 = vmul.f32 %v405, %v509
        %v518 = vmul.f32 %v406, %v510
        %v519 = vmul.f32 %v407, %v511
        %v520 = vmul.f32 %v408, %v512
        %v521 = vmul.f32 %v409, %v505
        %v522 = vmul.f32 %v410, %v506
        %v523 = vmul.f32 %v411, %v507
        %v524 = vmul.f32 %v412, %v508
        %v525 = vmul.f32 %v413, %v509
        %v526 = vmul.f32 %v414, %v510
        %v527 = vmul.f32 %v415, %v511
        %v528 = vmul.f32 %v416, %v512
        %v529 = vld [vmem:[#allocation6] sm:$0xff]
        %v530 = vld [vmem:[#allocation6 + $0x8] sm:$0xff]
        %v531 = vld [vmem:[#allocation6 + $0x10] sm:$0xff]
        %v532 = vld [vmem:[#allocation6 + $0x18] sm:$0xff]
        %v533 = vld [vmem:[#allocation6 + $0x20] sm:$0xff]
        %v534 = vld [vmem:[#allocation6 + $0x28] sm:$0xff]
        %v535 = vld [vmem:[#allocation6 + $0x30] sm:$0xff]
        %v536 = vld [vmem:[#allocation6 + $0x38] sm:$0xff]
        %v537 = vld [vmem:[#allocation7] sm:$0xff]
        %v538 = vld [vmem:[#allocation7 + $0x8] sm:$0xff]
        %v539 = vld [vmem:[#allocation7 + $0x10] sm:$0xff]
        %v540 = vld [vmem:[#allocation7 + $0x18] sm:$0xff]
        %v541 = vld [vmem:[#allocation7 + $0x20] sm:$0xff]
        %v542 = vld [vmem:[#allocation7 + $0x28] sm:$0xff]
        %v543 = vld [vmem:[#allocation7 + $0x30] sm:$0xff]
        %v544 = vld [vmem:[#allocation7 + $0x38] sm:$0xff]
        %v546 = vsel %vm336, %v521, 0
        %v549 = vsel %vm336, %v522, 0
        %v552 = vsel %vm336, %v523, 0
        %v555 = vsel %vm336, %v524, 0
        %v558 = vsel %vm336, %v525, 0
        %v561 = vsel %vm336, %v526, 0
        %v564 = vsel %vm336, %v527, 0
        %v567 = vsel %vm336, %v528, 0
        %569 = vmatprep.subr.mxu0 0.0
        %570 = vmatpush1.msra.mxu0 0.0
        %571 = vmatprep.subr.mxu0 0.0
        %572 = vmatpush1.msra.mxu0 0.0
        %573 = vmatprep.subr.mxu0 0.0
        %574 = vmatpush1.msra.mxu0 0.0
        %575 = vmatprep.subr.mxu0 0.0
        %576 = vmatpush1.msra.mxu0 0.0
        %577 = vmatprep.subr.mxu0 0.0
        %578 = vmatpush1.msra.mxu0 0.0
        %579 = vmatprep.subr.mxu0 0.0
        %580 = vmatpush1.msra.mxu0 0.0
        %581 = vmatprep.subr.mxu0 0.0
        %582 = vmatpush1.msra.mxu0 0.0
        %583 = vmatprep.subr.mxu0 0.0
        %584 = vmatpush1.msra.mxu0 0.0
        %585 = vmatprep.subr.mxu0 0.0
        %586 = vmatpush1.msra.mxu0 %v544
        %587 = vmatprep.subr.mxu0 0.0
        %588 = vmatpush1.msra.mxu0 %v543
        %589 = vmatprep.subr.mxu0 0.0
        %590 = vmatpush1.msra.mxu0 %v542
        %591 = vmatprep.subr.mxu0 0.0
        %592 = vmatpush1.msra.mxu0 %v541
        %593 = vmatprep.subr.mxu0 0.0
        %594 = vmatpush1.msra.mxu0 %v540
        %595 = vmatprep.subr.mxu0 0.0
        %596 = vmatpush1.msra.mxu0 %v539
        %597 = vmatprep.subr.mxu0 0.0
        %598 = vmatpush1.msra.mxu0 %v538
        %599 = vmatprep.subr.mxu0 0.0
        %600 = vmatpush1.msra.mxu0 %v537
        %601 = vmatprep.subr.mxu0 0.0
        %602 = vmatpush2.msra.mxu0 0.0
        %603 = vmatprep.subr.mxu0 0.0
        %604 = vmatpush2.msra.mxu0 0.0
        %605 = vmatprep.subr.mxu0 0.0
        %606 = vmatpush2.msra.mxu0 0.0
        %607 = vmatprep.subr.mxu0 0.0
        %608 = vmatpush2.msra.mxu0 0.0
        %609 = vmatprep.subr.mxu0 0.0
        %610 = vmatpush2.msra.mxu0 0.0
        %611 = vmatprep.subr.mxu0 0.0
        %612 = vmatpush2.msra.mxu0 0.0
        %613 = vmatprep.subr.mxu0 0.0
        %614 = vmatpush2.msra.mxu0 0.0
        %615 = vmatprep.subr.mxu0 0.0
        %616 = vmatpush2.msra.mxu0 0.0
        %617 = vmatprep.subr.mxu0 0.0
        %618 = vmatpush2.msra.mxu0 0.0
        %619 = vmatprep.subr.mxu0 0.0
        %620 = vmatpush2.msra.mxu0 0.0
        %621 = vmatprep.subr.mxu0 0.0
        %622 = vmatpush2.msra.mxu0 0.0
        %623 = vmatprep.subr.mxu0 0.0
        %624 = vmatpush2.msra.mxu0 0.0
        %625 = vmatprep.subr.mxu0 0.0
        %626 = vmatpush2.msra.mxu0 0.0
        %627 = vmatprep.subr.mxu0 0.0
        %628 = vmatpush2.msra.mxu0 0.0
        %629 = vmatprep.subr.mxu0 0.0
        %630 = vmatpush2.msra.mxu0 0.0
        %631 = vmatprep.subr.mxu0 0.0
        %632 = vmatpush2.msra.mxu0 0.0
        %633 = vmatprep.mubr.f32.mxu0 0.0
        %634 = vmatmul.mubr.f32.gmra.mxu0 %v546
        %v635 = vpop.f32.mrf.mxu0
        %v636 = vadd.f32 0.0, %v635
        %v637 = vpop.f32.mrf.mxu0
        %638 = vmatprep.mubr.f32.mxu0 0.0
        %639 = vmatmul.mubr.f32.gmra.mxu0 %v549
        %v640 = vpop.f32.mrf.mxu0
        %v641 = vadd.f32 0.0, %v640
        %v642 = vpop.f32.mrf.mxu0
        %643 = vmatprep.mubr.f32.mxu0 0.0
        %644 = vmatmul.mubr.f32.gmra.mxu0 %v552
        %v645 = vpop.f32.mrf.mxu0
        %v646 = vadd.f32 0.0, %v645
        %v647 = vpop.f32.mrf.mxu0
        %648 = vmatprep.mubr.f32.mxu0 0.0
        %649 = vmatmul.mubr.f32.gmra.mxu0 %v555
        %v650 = vpop.f32.mrf.mxu0
        %v651 = vadd.f32 0.0, %v650
        %v652 = vpop.f32.mrf.mxu0
        %653 = vmatprep.mubr.f32.mxu0 0.0
        %654 = vmatmul.mubr.f32.gmra.mxu0 %v558
        %v655 = vpop.f32.mrf.mxu0
        %v656 = vadd.f32 0.0, %v655
        %v657 = vpop.f32.mrf.mxu0
        %658 = vmatprep.mubr.f32.mxu0 0.0
        %659 = vmatmul.mubr.f32.gmra.mxu0 %v561
        %v660 = vpop.f32.mrf.mxu0
        %v661 = vadd.f32 0.0, %v660
        %v662 = vpop.f32.mrf.mxu0
        %663 = vmatprep.mubr.f32.mxu0 0.0
        %664 = vmatmul.mubr.f32.gmra.mxu0 %v564
        %v665 = vpop.f32.mrf.mxu0
        %v666 = vadd.f32 0.0, %v665
        %v667 = vpop.f32.mrf.mxu0
        %668 = vmatprep.mubr.f32.mxu0 0.0
        %669 = vmatmul.mubr.f32.gmra.mxu0 %v567
        %v670 = vpop.f32.mrf.mxu0
        %v671 = vadd.f32 0.0, %v670
        %v672 = vpop.f32.mrf.mxu0
        %673 = vdwg.mxu0
        %v675 = vsel %vm336, %v513, 0
        %v678 = vsel %vm336, %v514, 0
        %v681 = vsel %vm336, %v515, 0
        %v684 = vsel %vm336, %v516, 0
        %v687 = vsel %vm336, %v517, 0
        %v690 = vsel %vm336, %v518, 0
        %v693 = vsel %vm336, %v519, 0
        %v696 = vsel %vm336, %v520, 0
        %698 = vmatprep.subr.mxu0 0.0
        %699 = vmatpush1.msra.mxu0 0.0
        %700 = vmatprep.subr.mxu0 0.0
        %701 = vmatpush1.msra.mxu0 0.0
        %702 = vmatprep.subr.mxu0 0.0
        %703 = vmatpush1.msra.mxu0 0.0
        %704 = vmatprep.subr.mxu0 0.0
        %705 = vmatpush1.msra.mxu0 0.0
        %706 = vmatprep.subr.mxu0 0.0
        %707 = vmatpush1.msra.mxu0 0.0
        %708 = vmatprep.subr.mxu0 0.0
        %709 = vmatpush1.msra.mxu0 0.0
        %710 = vmatprep.subr.mxu0 0.0
        %711 = vmatpush1.msra.mxu0 0.0
        %712 = vmatprep.subr.mxu0 0.0
        %713 = vmatpush1.msra.mxu0 0.0
        %714 = vmatprep.subr.mxu0 0.0
        %715 = vmatpush1.msra.mxu0 %v536
        %716 = vmatprep.subr.mxu0 0.0
        %717 = vmatpush1.msra.mxu0 %v535
        %718 = vmatprep.subr.mxu0 0.0
        %719 = vmatpush1.msra.mxu0 %v534
        %720 = vmatprep.subr.mxu0 0.0
        %721 = vmatpush1.msra.mxu0 %v533
        %722 = vmatprep.subr.mxu0 0.0
        %723 = vmatpush1.msra.mxu0 %v532
        %724 = vmatprep.subr.mxu0 0.0
        %725 = vmatpush1.msra.mxu0 %v531
        %726 = vmatprep.subr.mxu0 0.0
        %727 = vmatpush1.msra.mxu0 %v530
        %728 = vmatprep.subr.mxu0 0.0
        %729 = vmatpush1.msra.mxu0 %v529
        %730 = vmatprep.subr.mxu0 0.0
        %731 = vmatpush2.msra.mxu0 0.0
        %732 = vmatprep.subr.mxu0 0.0
        %733 = vmatpush2.msra.mxu0 0.0
        %734 = vmatprep.subr.mxu0 0.0
        %735 = vmatpush2.msra.mxu0 0.0
        %736 = vmatprep.subr.mxu0 0.0
        %737 = vmatpush2.msra.mxu0 0.0
        %738 = vmatprep.subr.mxu0 0.0
        %739 = vmatpush2.msra.mxu0 0.0
        %740 = vmatprep.subr.mxu0 0.0
        %741 = vmatpush2.msra.mxu0 0.0
        %742 = vmatprep.subr.mxu0 0.0
        %743 = vmatpush2.msra.mxu0 0.0
        %744 = vmatprep.subr.mxu0 0.0
        %745 = vmatpush2.msra.mxu0 0.0
        %746 = vmatprep.subr.mxu0 0.0
        %747 = vmatpush2.msra.mxu0 0.0
        %748 = vmatprep.subr.mxu0 0.0
        %749 = vmatpush2.msra.mxu0 0.0
        %750 = vmatprep.subr.mxu0 0.0
        %751 = vmatpush2.msra.mxu0 0.0
        %752 = vmatprep.subr.mxu0 0.0
        %753 = vmatpush2.msra.mxu0 0.0
        %754 = vmatprep.subr.mxu0 0.0
        %755 = vmatpush2.msra.mxu0 0.0
        %756 = vmatprep.subr.mxu0 0.0
        %757 = vmatpush2.msra.mxu0 0.0
        %758 = vmatprep.subr.mxu0 0.0
        %759 = vmatpush2.msra.mxu0 0.0
        %760 = vmatprep.subr.mxu0 0.0
        %761 = vmatpush2.msra.mxu0 0.0
        %762 = vmatprep.mubr.f32.mxu0 0.0
        %763 = vmatmul.mubr.f32.gmra.mxu0 %v675
        %v764 = vpop.f32.mrf.mxu0
        %v765 = vadd.f32 %v636, %v764
        %v766 = vpop.f32.mrf.mxu0
        %767 = vmatprep.mubr.f32.mxu0 0.0
        %768 = vmatmul.mubr.f32.gmra.mxu0 %v678
        %v769 = vpop.f32.mrf.mxu0
        %v770 = vadd.f32 %v641, %v769
        %v771 = vpop.f32.mrf.mxu0
        %772 = vmatprep.mubr.f32.mxu0 0.0
        %773 = vmatmul.mubr.f32.gmra.mxu0 %v681
        %v774 = vpop.f32.mrf.mxu0
        %v775 = vadd.f32 %v646, %v774
        %v776 = vpop.f32.mrf.mxu0
        %777 = vmatprep.mubr.f32.mxu0 0.0
        %778 = vmatmul.mubr.f32.gmra.mxu0 %v684
        %v779 = vpop.f32.mrf.mxu0
        %v780 = vadd.f32 %v651, %v779
        %v781 = vpop.f32.mrf.mxu0
        %782 = vmatprep.mubr.f32.mxu0 0.0
        %783 = vmatmul.mubr.f32.gmra.mxu0 %v687
        %v784 = vpop.f32.mrf.mxu0
        %v785 = vadd.f32 %v656, %v784
        %v786 = vpop.f32.mrf.mxu0
        %787 = vmatprep.mubr.f32.mxu0 0.0
        %788 = vmatmul.mubr.f32.gmra.mxu0 %v690
        %v789 = vpop.f32.mrf.mxu0
        %v790 = vadd.f32 %v661, %v789
        %v791 = vpop.f32.mrf.mxu0
        %792 = vmatprep.mubr.f32.mxu0 0.0
        %793 = vmatmul.mubr.f32.gmra.mxu0 %v693
        %v794 = vpop.f32.mrf.mxu0
        %v795 = vadd.f32 %v666, %v794
        %v796 = vpop.f32.mrf.mxu0
        %797 = vmatprep.mubr.f32.mxu0 0.0
        %798 = vmatmul.mubr.f32.gmra.mxu0 %v696
        %v799 = vpop.f32.mrf.mxu0
        %v800 = vadd.f32 %v671, %v799
        %v801 = vpop.f32.mrf.mxu0
        %802 = vdwg.mxu0
        %v803 = vld [vmem:[%s4] sm:$0x1]
        %v805 = vlaneseq
        %v806 = vshrl.u32 %v805, 7
        %v807 = vsub.s32 0, %v806
        %v808 = vrot.slane %v803, %v807
        %v810 = vadd.f32 %v765, %v808
        %v811 = vadd.f32 %v770, %v808
        %v812 = vadd.f32 %v775, %v808
        %v813 = vadd.f32 %v780, %v808
        %v814 = vadd.f32 %v785, %v808
        %v815 = vadd.f32 %v790, %v808
        %v816 = vadd.f32 %v795, %v808
        %v817 = vadd.f32 %v800, %v808
        %818 = vst.msk [vmem:[%s318] sm:$0xff] %vm336, %v810
        %819 = vst.msk [vmem:[%s318 + $0x8] sm:$0xff] %vm336, %v811
        %820 = vst.msk [vmem:[%s318 + $0x10] sm:$0xff] %vm336, %v812
        %821 = vst.msk [vmem:[%s318 + $0x18] sm:$0xff] %vm336, %v813
        %822 = vst.msk [vmem:[%s318 + $0x20] sm:$0xff] %vm336, %v814
        %823 = vst.msk [vmem:[%s318 + $0x28] sm:$0xff] %vm336, %v815
        %824 = vst.msk [vmem:[%s318 + $0x30] sm:$0xff] %vm336, %v816
        %825 = vst.msk [vmem:[%s318 + $0x38] sm:$0xff] %vm336, %v817
        %s826 = smul.u32 8, %s23
        %p827 = scmp.lt.s32.totalorder %s826, 15
        %s828 = scalar_select %p827, %s826, 15
        %s829 = smul.addr %s828, 8
        %s830 = scalar_lea.vmem %s5, %s829
        // Predicated region
        $region57: #{tpu_custom_call.1} parent=39 // pred_check
          %p831 = pneg %p156
        $region58: #{tpu_custom_call.1} parent=39 // pred_check_branch
          %833 = sbr.rel (%p831) target = $region60
        $region59: #{tpu_custom_call.1} parent=39 // pred_region
          %s834 = smul.u32 8, %s23
        $region60: #{tpu_custom_call.1} parent=39 // pred_fallthru
          _
      $region40: #{tpu_custom_call.1} parent=5 // pred_fallthru
        _
      %p835 = scmp.le.s32.totalorder 2, %s18
      // Predicated region
      $region61: #{tpu_custom_call.1} parent=5 // pred_check
        %p836 = pneg %p835
      $region62: #{tpu_custom_call.1} parent=5 // pred_check_branch
        %838 = sbr.rel (%p836) target = $region64
      $region63: #{tpu_custom_call.1} parent=5 // pred_region
        %s839 = ssub.s32 %s18, 2
        // Predicated region
        $region65: #{tpu_custom_call.1} parent=63 // pred_check
          %p840 = pneg %p162
        $region66: #{tpu_custom_call.1} parent=63 // pred_check_branch
          %842 = sbr.rel (%p840) target = $region68
        $region67: #{tpu_custom_call.1} parent=63 // pred_region
          %s843 = smul.u32 8, %s24
          %p844 = scmp.lt.s32.totalorder %s843, 15
          %s845 = scalar_select %p844, %s843, 15
          %s846 = smul.addr %s845, 8
          %s847 = scalar_lea.vmem %s5, %s846
        $region68: #{tpu_custom_call.1} parent=63 // pred_fallthru
          _
      $region64: #{tpu_custom_call.1} parent=5 // pred_fallthru
        _
    $region6: #{tpu_custom_call.1} parent=1 // loop_footer
      %s22 = sadd.s32 1, %s18
    $region7: #{tpu_custom_call.1} parent=1 // loop_footer_branch
      %17 = sbr.rel target = $region3
    $region8: #{tpu_custom_call.1} parent=1 // loop_exit
      _
    %848 = vsyncpa [#allocation3], 1
    %s849 = scalar_lea.sflag [#allocation3], 1
    %850 = vsyncpa %s849, 1
    %851 = vsyncpa [#allocation5], 1
    %s852 = scalar_lea.sflag [#allocation5], 1
    %853 = vsyncpa %s852, 1
    %854 = vsyncpa [#allocation8], 1

</llo_original>
